<compile_context>
chip_gen: v7x
topology: tpu7x:2x2x1
jax: 0.10.0
libtpu: 0.0.40
codegen_flags: <defaults>
</compile_context>

<pallas_src>
import jax
import jax.numpy as jnp
from jax.experimental import pallas as pl
from jax.experimental.pallas import tpu as pltpu


def _resnet_decoder_kernel(x_ref, w_ref, b_ref, o_ref, acc_ref):
    # x_ref : (tn, tc, HW)  input tile (spatial already flattened, lane-dense)
    # w_ref : (tc, Kp)      weight tile, pre-scaled by 1/(H*W)
    # b_ref : (1,  Kp)      bias (padded to Kp lanes)
    # o_ref : (tn, Kp)      output tile (resident across the C reduction axis)
    # acc_ref: (tn, Kp) f32 accumulator scratch
    c = pl.program_id(1)

    @pl.when(c == 0)
    def _():
        acc_ref[...] = jnp.zeros_like(acc_ref)

    # Global-average-pool partial sum over the flattened spatial axis.
    # Accumulate in f32 without materializing an upcast copy of the tile.
    pooled = jnp.sum(x_ref[...], axis=-1, dtype=jnp.float32)      # (tn, tc)

    # Partial FC: pooled @ (W.T * 1/(H*W)) accumulated over channel tiles.
    acc_ref[...] += jnp.dot(pooled, w_ref[...],
                            preferred_element_type=jnp.float32)

    @pl.when(c == pl.num_programs(1) - 1)
    def _():
        o_ref[...] = (acc_ref[...] + b_ref[...]).astype(o_ref.dtype)


def resnet_decoder(x, weight, bias, *, tn=128, tc=256):
    """Forward of ResnetDecoder.

    x      : (N, C, H, W)   activations (NCHW, like PyTorch)
    weight : (K, C)         nn.Linear.weight
    bias   : (K,)           nn.Linear.bias
    returns: (N, K) float32
    """
    N, C, H, W = x.shape
    K = weight.shape[0]
    HW = H * W

    # --- wrapper-side layout plumbing (free: contiguous reshapes / padding) ---
    x3 = x.reshape(N, C, HW)

    # Fold the pooling scale into the weight; pre-transpose to (C, K).
    w_t = (jnp.asarray(weight, jnp.float32).T) * (1.0 / float(HW))   # (C, K)

    # Pad the class dim to a multiple of 128 for lane-dense weight/output tiles.
    Kp = max(128, ((K + 127) // 128) * 128)
    w_pad = jnp.zeros((C, Kp), jnp.float32).at[:, :K].set(w_t)
    b_pad = jnp.zeros((1, Kp), jnp.float32).at[0, :K].set(
        jnp.asarray(bias, jnp.float32))

    # --- tile sizes (adapt down for small shapes; keep divisibility) ---------
    tn = min(tn, N)
    if N % tn != 0:
        tn = N  # TODO(synk): masked tail handling for non-divisible batch
    tc = min(tc, C)
    if C % tc != 0:
        tc = C

    grid = (N // tn, C // tc)

    # --- VMEM budget: double-buffered tiles + accumulator, capped for v7x ----
    x_bytes = tn * tc * HW * x3.dtype.itemsize
    w_bytes = tc * Kp * 4
    b_bytes = Kp * 4
    o_bytes = tn * Kp * 4
    acc_bytes = tn * Kp * 4
    est = 2 * (x_bytes + w_bytes + b_bytes + o_bytes) + acc_bytes
    vmem_limit = int(min(max(2 * est, 32 * 1024 * 1024), 64 * 1024 * 1024))

    out_padded = pl.pallas_call(
        _resnet_decoder_kernel,
        out_shape=jax.ShapeDtypeStruct((N, Kp), jnp.float32),
        grid_spec=pltpu.PrefetchScalarGridSpec(
            num_scalar_prefetch=0,
            grid=grid,
            in_specs=[
                pl.BlockSpec((tn, tc, HW), lambda i, c: (i, c, 0)),
                pl.BlockSpec((tc, Kp), lambda i, c: (c, 0)),
                pl.BlockSpec((1, Kp), lambda i, c: (0, 0)),
            ],
            out_specs=pl.BlockSpec((tn, Kp), lambda i, c: (i, 0)),
            scratch_shapes=[pltpu.VMEM((tn, Kp), jnp.float32)],
        ),
        compiler_params=pltpu.CompilerParams(
            dimension_semantics=("parallel", "arbitrary"),
            vmem_limit_bytes=vmem_limit,
        ),
    )(x3, w_pad, b_pad)

    return out_padded[:, :K]


if __name__ == "__main__":
    # Small shapes consistent with the module's forward pass.
    N, C, H, W = 2, 4, 16, 16       # batch, in_features (channels), spatial
    K = 10                          # n_classes

    key = jax.random.PRNGKey(0)
    kx, kw, kb = jax.random.split(key, 3)

    x = jax.random.normal(kx, (N, C, H, W), dtype=jnp.float32)

    # Deterministic Linear(in_features=C, n_classes=K) init
    # (PyTorch-style uniform(-1/sqrt(C), 1/sqrt(C))).
    bound = 1.0 / jnp.sqrt(jnp.float32(C))
    weight = jax.random.uniform(kw, (K, C), minval=-bound, maxval=bound,
                                dtype=jnp.float32)   # torch shape (K, C)
    bias = jax.random.uniform(kb, (K,), minval=-bound, maxval=bound,
                              dtype=jnp.float32)

    out = resnet_decoder(x, weight, bias)
    out = jax.block_until_ready(out)

    # Pure-JAX reference of the PyTorch forward.
    pooled_ref = jnp.mean(x, axis=(2, 3))           # AdaptiveAvgPool2d((1,1)) + view
    ref = pooled_ref @ weight.T + bias              # nn.Linear

    assert out.shape == (N, K)
    assert jnp.allclose(out, ref, atol=1e-5, rtol=1e-5), (out, ref)
    print("KERNEL_OK")
</pallas_src>

<mosaic_0001>
module attributes {stable_mosaic.version = 11 : i64} {
  func.func @_resnet_decoder_kernel(%arg0: i32, %arg1: i32, %arg2: memref<2x4x256xf32, #tpu.memory_space<vmem>>, %arg3: memref<4x128xf32, #tpu.memory_space<vmem>>, %arg4: memref<1x128xf32, #tpu.memory_space<vmem>>, %arg5: memref<2x128xf32, #tpu.memory_space<vmem>>, %arg6: memref<2x128xf32, #tpu.memory_space<vmem>>) attributes {dimension_semantics = [#tpu.dimension_semantics<parallel>, #tpu.dimension_semantics<arbitrary>], iteration_bounds = array<i64: 1, 1>, scalar_prefetch = 0 : i64, scratch_operands = 1 : i64, tpu.core_type = #tpu.core_type<tc>, window_params = [{transform_indices = @transform_0, window_bounds = array<i64: 2, 4, 256>}, {transform_indices = @transform_1, window_bounds = array<i64: 4, 128>}, {pipeline_mode = #tpu.pipeline_mode<synchronous>, transform_indices = @transform_2, window_bounds = array<i64: 1, 128>}, {transform_indices = @transform_3, window_bounds = array<i64: 2, 128>}]} {
    %c0_i32 = arith.constant 0 : i32
    %0 = arith.cmpi eq, %arg1, %c0_i32 : i32
    %1 = arith.extui %0 : i1 to i32
    %c0_i32_0 = arith.constant 0 : i32
    %2 = arith.cmpi ne, %1, %c0_i32_0 : i32
    scf.if %2 {
      %cst_12 = arith.constant 0.000000e+00 : f32
      %13 = vector.broadcast %cst_12 : f32 to vector<2x128xf32>
      %c0_13 = arith.constant 0 : index
      %c0_14 = arith.constant 0 : index
      %14 = vector.load %arg6[%c0_13, %c0_14] : memref<2x128xf32, #tpu.memory_space<vmem>>, vector<2x128xf32>
      tpu.vector_store %arg6[%c0_13, %c0_14], %13 {strides = array<i32>} : memref<2x128xf32, #tpu.memory_space<vmem>>, vector<2x128xf32>,
    } else {
    }
    %c0 = arith.constant 0 : index
    %c0_1 = arith.constant 0 : index
    %c0_2 = arith.constant 0 : index
    %3 = vector.load %arg2[%c0, %c0_1, %c0_2] : memref<2x4x256xf32, #tpu.memory_space<vmem>>, vector<2x4x256xf32>
    %cst = arith.constant dense<0.000000e+00> : vector<2x4xf32>
    %4 = vector.multi_reduction <add>, %3, %cst [2] : vector<2x4x256xf32> to vector<2x4xf32>
    %c0_3 = arith.constant 0 : index
    %c0_4 = arith.constant 0 : index
    %5 = vector.load %arg6[%c0_3, %c0_4] : memref<2x128xf32, #tpu.memory_space<vmem>>, vector<2x128xf32>
    %c0_5 = arith.constant 0 : index
    %c0_6 = arith.constant 0 : index
    %6 = vector.load %arg3[%c0_5, %c0_6] : memref<4x128xf32, #tpu.memory_space<vmem>>, vector<4x128xf32>
    %cst_7 = arith.constant dense<0.000000e+00> : vector<2x128xf32>
    %7 = tpu.matmul %4, %6, %cst_7 {dimension_numbers = #tpu.dot_dimension_numbers<[1], [0], [0], [1], [0, 0, 1, 1], [], []>} : vector<2x4xf32>, vector<4x128xf32>, vector<2x128xf32> -> vector<2x128xf32>
    %8 = arith.addf %5, %7 : vector<2x128xf32>
    %c0_8 = arith.constant 0 : index
    %c0_9 = arith.constant 0 : index
    %9 = vector.load %arg6[%c0_8, %c0_9] : memref<2x128xf32, #tpu.memory_space<vmem>>, vector<2x128xf32>
    tpu.vector_store %arg6[%c0_8, %c0_9], %8 {strides = array<i32>} : memref<2x128xf32, #tpu.memory_space<vmem>>, vector<2x128xf32>,
    %c0_i32_10 = arith.constant 0 : i32
    %10 = arith.cmpi eq, %arg1, %c0_i32_10 : i32
    %11 = arith.extui %10 : i1 to i32
    %c0_i32_11 = arith.constant 0 : i32
    %12 = arith.cmpi ne, %11, %c0_i32_11 : i32
    scf.if %12 {
      %c0_12 = arith.constant 0 : index
      %c0_13 = arith.constant 0 : index
      %13 = vector.load %arg6[%c0_12, %c0_13] : memref<2x128xf32, #tpu.memory_space<vmem>>, vector<2x128xf32>
      %c0_14 = arith.constant 0 : index
      %c0_15 = arith.constant 0 : index
      %14 = vector.load %arg4[%c0_14, %c0_15] : memref<1x128xf32, #tpu.memory_space<vmem>>, vector<1x128xf32>
      %15 = vector.broadcast %14 : vector<1x128xf32> to vector<2x128xf32>
      %16 = arith.addf %13, %15 : vector<2x128xf32>
      %c0_16 = arith.constant 0 : index
      %c0_17 = arith.constant 0 : index
      %17 = vector.load %arg5[%c0_16, %c0_17] : memref<2x128xf32, #tpu.memory_space<vmem>>, vector<2x128xf32>
      tpu.vector_store %arg5[%c0_16, %c0_17], %16 {strides = array<i32>} : memref<2x128xf32, #tpu.memory_space<vmem>>, vector<2x128xf32>,
    } else {
    }
    return
  }
  func.func @transform_0(%arg0: i32, %arg1: i32) -> (i32, i32, i32) {
    %c0_i32 = arith.constant 0 : i32
    %c0_i32_0 = arith.constant 0 : i32
    return %arg0, %arg1, %c0_i32 : i32, i32, i32
  }
  func.func @transform_1(%arg0: i32, %arg1: i32) -> (i32, i32) {
    %c0_i32 = arith.constant 0 : i32
    %c0_i32_0 = arith.constant 0 : i32
    return %arg1, %c0_i32 : i32, i32
  }
  func.func @transform_2(%arg0: i32, %arg1: i32) -> (i32, i32) {
    %c0_i32 = arith.constant 0 : i32
    %c0_i32_0 = arith.constant 0 : i32
    %c0_i32_1 = arith.constant 0 : i32
    return %c0_i32, %c0_i32_0 : i32, i32
  }
  func.func @transform_3(%arg0: i32, %arg1: i32) -> (i32, i32) {
    %c0_i32 = arith.constant 0 : i32
    %c0_i32_0 = arith.constant 0 : i32
    return %arg0, %c0_i32 : i32, i32
  }
}

</mosaic_0001>

<llo_original>
// kernel: tpu_custom_call.1
$region0: #{tpu_custom_call.1}
  #allocation0 [shape = 'u32[]', space=smem, size = 0x4, offset = 0x4, fixed_abs, tag = 'smem constant byte address 0x4 - core index']
  #allocation1 [shape = 'u32[144,128]{1,0:T(1,128)}', space=vmem, size = 0x12000, scoped, tag = 'internal scratch']
  #allocation2 [shape = 'f32[2,128]{1,0:T(2,128)}', space=vmem, size = 0x400, scoped, tag = 'scratch operand']
  %s0 = inlined_call_operand.hbm [shape: f32[2,4,256], index: 0, kind: input, shape index: {}]
  %s1 = inlined_call_operand.hbm [shape: f32[4,128], index: 1, kind: input, shape index: {}]
  %s2 = inlined_call_operand.vmem [shape: f32[1,128], index: 2, kind: input, shape index: {}]
  %s3 = inlined_call_operand.hbm [shape: f32[2,128], index: 3, kind: output, shape index: {}]
  %s4 = sld [smem:[#allocation0]]
  $region38: #{tpu_custom_call.1} parent=0
    _
  %s6 = ssub.s32 1, %s4
  %s7 = scalar_select 0, %s6, %s4
  $region1: #{tpu_custom_call.1} parent=0
    #allocation3 [shape = 'u8[8192]{0}', space=vmem, size = 0x2000, scoped, tag = 'input window, operand 0, single buffered']
    #allocation4 [shape = 's32[1]{0}', space=sflag, size = 0x4, scoped, tag = 'scoped memory for tpu_custom_call.1']
    #allocation5 [shape = 's32[1]{0}', space=sflag, size = 0x4, scoped, tag = 'scoped memory for tpu_custom_call.1']
    #allocation6 [shape = 'u8[2048]{0}', space=vmem, size = 0x800, scoped, tag = 'input window, operand 1, single buffered']
    #allocation7 [shape = 's32[1]{0}', space=sflag, size = 0x4, scoped, tag = 'scoped memory for tpu_custom_call.1']
    #allocation8 [shape = 'u8[1024]{0}', space=vmem, size = 0x400, scoped, tag = 'output window, operand 0, single buffered']
    %8 = vsyncpa [#allocation4], 0
    %9 = vsyncpa [#allocation7], 0
    %10 = vsyncpa [#allocation5], 0
    // Predicated region
    $region2: #{tpu_custom_call.1} parent=1 // pred_check
      _
    $region3: #{tpu_custom_call.1} parent=1 // pred_check_branch
      %12 = sbr.rel (0) target = $region5
    $region4: #{tpu_custom_call.1} parent=1 // pred_region
      %s14 = ssub.s32 256, 256
      %15 = vsyncadd [#allocation4], %s14
      %s16 = sshll.u32 [#allocation3], 4
      %s17 = int_to_ptr.vmem [resolvable:$true] %s16
      %22 = dma.hbm_to_vmem [thread:$0]  %s0, 256, %s17, [#allocation4], 128, 128, 8
    $region5: #{tpu_custom_call.1} parent=1 // pred_fallthru
      _
    // Predicated region
    $region6: #{tpu_custom_call.1} parent=1 // pred_check
      _
    $region7: #{tpu_custom_call.1} parent=1 // pred_check_branch
      %24 = sbr.rel (0) target = $region9
    $region8: #{tpu_custom_call.1} parent=1 // pred_region
      %s26 = ssub.s32 64, 64
      %27 = vsyncadd [#allocation7], %s26
      %s29 = sshll.u32 [#allocation6], 4
      %s30 = int_to_ptr.vmem [resolvable:$true] %s29
      %32 = dma.hbm_to_vmem [thread:$0]  %s1, 64, %s30, [#allocation7]
    $region9: #{tpu_custom_call.1} parent=1 // pred_fallthru
      _
    // Predicated region
    $region10: #{tpu_custom_call.1} parent=1 // pred_check
      _
    $region11: #{tpu_custom_call.1} parent=1 // pred_check_branch
      %34 = sbr.rel (0) target = $region13
    $region12: #{tpu_custom_call.1} parent=1 // pred_region
      _
    $region13: #{tpu_custom_call.1} parent=1 // pred_fallthru
      _
    // Predicated region
    $region14: #{tpu_custom_call.1} parent=1 // pred_check
      _
    $region15: #{tpu_custom_call.1} parent=1 // pred_check_branch
      %36 = sbr.rel (0) target = $region17
    $region16: #{tpu_custom_call.1} parent=1 // pred_region
      %37 = dma.done [#allocation4], 256
    $region17: #{tpu_custom_call.1} parent=1 // pred_fallthru
      _
    // Predicated region
    $region18: #{tpu_custom_call.1} parent=1 // pred_check
      _
    $region19: #{tpu_custom_call.1} parent=1 // pred_check_branch
      %39 = sbr.rel (0) target = $region21
    $region20: #{tpu_custom_call.1} parent=1 // pred_region
      %40 = dma.done [#allocation7], 64
    $region21: #{tpu_custom_call.1} parent=1 // pred_fallthru
      _
    %p41 = scmp.eq.s32.totalorder 0, 0
    // Predicated region
    $region22: #{tpu_custom_call.1} parent=1 // pred_check
      %p42 = pneg %p41
    $region23: #{tpu_custom_call.1} parent=1 // pred_check_branch
      %44 = sbr.rel (%p42) target = $region25
    $region24: #{tpu_custom_call.1} parent=1 // pred_region
      %45 = vst [vmem:[#allocation2] sm:$0x3] 0.0
    $region25: #{tpu_custom_call.1} parent=1 // pred_fallthru
      _
    %v46 = vld [vmem:[#allocation3] sm:$0xff]
    %v47 = vld [vmem:[#allocation3 + $0x8] sm:$0xff]
    %v50 = vcombine.high %v46, %v46
    %v51 = vcombine.high %v47, %v47
    %vm54 = vcmask 1043456
    %v55 = vsel %vm54, %v46, 0.0
    %v56 = vsel %vm54, %v50, 0.0
    %v57 = vadd.f32 %v55, %v56
    %58 = vadd.xlane.f32.xlu0 %v57
    %v59 = vpop.xlane.xlu0 %58
    %v60 = vsel %vm54, %v47, 0.0
    %v61 = vsel %vm54, %v51, 0.0
    %v62 = vadd.f32 %v60, %v61
    %63 = vadd.xlane.f32.xlu0 %v62
    %v64 = vpop.xlane.xlu0 %63
    %v65 = vld [vmem:[#allocation2] sm:$0x3]
    %v66 = vld [vmem:[#allocation6] sm:$0xf]
    %v69 = vlaneseq
    %v70 = vand.u32 %v69, 127
    %v71 = vlaneseq
    %v72 = vshrl.u32 %v71, 7
    %v73 = vsub.s32 %v70, %v72
    %v74 = vrot.slane %v59, %v73
    %v75 = vlaneseq
    %v76 = vshrl.u32 %v75, 7
    %v77 = vsub.s32 %v70, %v76
    %v78 = vrot.slane %v64, %v77
    %vm79 = vcmask 1041409
    %v80 = vsel %vm79, %v78, %v74
    %vm81 = vcmask 31744
    %v82 = vsel %vm81, %v80, 0
    %v85 = vsel %vm54, %v66, 0
    %87 = vmatprep.subr.mxu0 0.0
    %88 = vmatpush1.msra.mxu0 %v85
    %89 = vmatprep.subr.mxu0 0.0
    %90 = vmatpush1.msra.mxu0 0.0
    %91 = vmatprep.subr.mxu0 0.0
    %92 = vmatpush1.msra.mxu0 0.0
    %93 = vmatprep.subr.mxu0 0.0
    %94 = vmatpush1.msra.mxu0 0.0
    %95 = vmatprep.subr.mxu0 0.0
    %96 = vmatpush1.msra.mxu0 0.0
    %97 = vmatprep.subr.mxu0 0.0
    %98 = vmatpush1.msra.mxu0 0.0
    %99 = vmatprep.subr.mxu0 0.0
    %100 = vmatpush1.msra.mxu0 0.0
    %101 = vmatprep.subr.mxu0 0.0
    %102 = vmatpush1.msra.mxu0 0.0
    %103 = vmatprep.subr.mxu0 0.0
    %104 = vmatpush1.msra.mxu0 0.0
    %105 = vmatprep.subr.mxu0 0.0
    %106 = vmatpush1.msra.mxu0 0.0
    %107 = vmatprep.subr.mxu0 0.0
    %108 = vmatpush1.msra.mxu0 0.0
    %109 = vmatprep.subr.mxu0 0.0
    %110 = vmatpush1.msra.mxu0 0.0
    %111 = vmatprep.subr.mxu0 0.0
    %112 = vmatpush1.msra.mxu0 0.0
    %113 = vmatprep.subr.mxu0 0.0
    %114 = vmatpush1.msra.mxu0 0.0
    %115 = vmatprep.subr.mxu0 0.0
    %116 = vmatpush1.msra.mxu0 0.0
    %117 = vmatprep.subr.mxu0 0.0
    %118 = vmatpush1.msra.mxu0 0.0
    %119 = vmatprep.subr.mxu0 0.0
    %120 = vmatpush1.msra.mxu0 0.0
    %121 = vmatprep.subr.mxu0 0.0
    %122 = vmatpush1.msra.mxu0 0.0
    %123 = vmatprep.subr.mxu0 0.0
    %124 = vmatpush1.msra.mxu0 0.0
    %125 = vmatprep.subr.mxu0 0.0
    %126 = vmatpush1.msra.mxu0 0.0
    %127 = vmatprep.subr.mxu0 0.0
    %128 = vmatpush1.msra.mxu0 0.0
    %129 = vmatprep.subr.mxu0 0.0
    %130 = vmatpush1.msra.mxu0 0.0
    %131 = vmatprep.subr.mxu0 0.0
    %132 = vmatpush1.msra.mxu0 0.0
    %133 = vmatprep.subr.mxu0 0.0
    %134 = vmatpush1.msra.mxu0 0.0
    %135 = vmatprep.subr.mxu0 0.0
    %136 = vmatpush1.msra.mxu0 0.0
    %137 = vmatprep.subr.mxu0 0.0
    %138 = vmatpush1.msra.mxu0 0.0
    %139 = vmatprep.subr.mxu0 0.0
    %140 = vmatpush1.msra.mxu0 0.0
    %141 = vmatprep.subr.mxu0 0.0
    %142 = vmatpush1.msra.mxu0 0.0
    %143 = vmatprep.subr.mxu0 0.0
    %144 = vmatpush1.msra.mxu0 0.0
    %145 = vmatprep.subr.mxu0 0.0
    %146 = vmatpush1.msra.mxu0 0.0
    %147 = vmatprep.subr.mxu0 0.0
    %148 = vmatpush1.msra.mxu0 0.0
    %149 = vmatprep.subr.mxu0 0.0
    %150 = vmatpush1.msra.mxu0 0.0
    %151 = vmatprep.mubr.f32.mxu0 0.0
    %152 = vmatmul.mubr.f32.gmra.mrb[0].mxu0 %v82
    %v153 = vpop.f32.mrb[0].mxu0
    %v154 = vadd.f32 0.0, %v153
    %v155 = vpop.f32.mrb[0].mxu0
    %156 = vdwg.mxu0
    %v157 = vadd.f32 %v65, %v154
    %158 = vst [vmem:[#allocation2] sm:$0x3] %v157
    // Predicated region
    $region26: #{tpu_custom_call.1} parent=1 // pred_check
      %p159 = pneg %p41
    $region27: #{tpu_custom_call.1} parent=1 // pred_check_branch
      %161 = sbr.rel (%p159) target = $region29
    $region28: #{tpu_custom_call.1} parent=1 // pred_region
      %v162 = vld [vmem:[#allocation2] sm:$0x3]
      %v163 = vld [vmem:[%s2] sm:$0x1]
      %v165 = vlaneseq
      %v166 = vshrl.u32 %v165, 7
      %v167 = vsub.s32 0, %v166
      %v168 = vrot.slane %v163, %v167
      %v170 = vadd.f32 %v162, %v168
      %171 = vst [vmem:[#allocation8] sm:$0x3] %v170
    $region29: #{tpu_custom_call.1} parent=1 // pred_fallthru
      _
    // Predicated region
    $region30: #{tpu_custom_call.1} parent=1 // pred_check
      _
    $region31: #{tpu_custom_call.1} parent=1 // pred_check_branch
      %173 = sbr.rel (0) target = $region33
    $region32: #{tpu_custom_call.1} parent=1 // pred_region
      %s175 = ssub.s32 32, 32
      %176 = vsyncadd [#allocation5], %s175
      %s178 = sshll.u32 [#allocation8], 4
      %s179 = int_to_ptr.vmem [resolvable:$true] %s178
      %181 = dma.vmem_to_hbm [thread:$0]  %s179, 32, %s3, [#allocation5]
    $region33: #{tpu_custom_call.1} parent=1 // pred_fallthru
      _
    // Predicated region
    $region34: #{tpu_custom_call.1} parent=1 // pred_check
      _
    $region35: #{tpu_custom_call.1} parent=1 // pred_check_branch
      %183 = sbr.rel (0) target = $region37
    $region36: #{tpu_custom_call.1} parent=1 // pred_region
      %184 = dma.done [#allocation5], 32
    $region37: #{tpu_custom_call.1} parent=1 // pred_fallthru
      _
    %185 = vsyncpa [#allocation4], 1
    %186 = vsyncpa [#allocation7], 1
    %187 = vsyncpa [#allocation5], 1

</llo_original>
